<compile_context>
chip_gen: v7x
topology: tpu7x:2x2x1
jax: 0.10.0
libtpu: 0.0.40
codegen_flags: <defaults>
</compile_context>

<pallas_src>
import functools

import jax
import jax.numpy as jnp
from jax.experimental import pallas as pl
from jax.experimental.pallas import tpu as pltpu


def shrinkage_kernel(x_ref, w1_ref, b1_ref, w2_ref, b2_ref, a_ref, o_ref, *,
                     inv_l):
    # Load the x tile and upcast once; all internal math is f32 even when the
    # I/O dtype is bf16.
    x = x_ref[...].astype(jnp.float32)                          # (TB, C, L)

    # AdaptiveAvgPool1d(1): mean over L, written as sum * (1/true_L) so the
    # kernel stays correct if L was zero-padded to a multiple of 128.
    mean = jnp.sum(x, axis=-1) * inv_l                          # (TB, C)

    # Conv1d(inp -> mip, k=1) with eval-mode BN pre-folded, then ReLU.
    y1 = jnp.dot(mean, w1_ref[...],
                 preferred_element_type=jnp.float32) + b1_ref[...]   # (TB, mip)
    y1 = jnp.maximum(y1, 0.0)

    # Conv1d(mip -> oup, k=1) + Hardsigmoid.
    y2 = jnp.dot(y1, w2_ref[...],
                 preferred_element_type=jnp.float32) + b2_ref[...]   # (TB, C)
    hs = jnp.clip((y2 + 3.0) * (1.0 / 6.0), 0.0, 1.0)

    # threshold = average * fc(average)
    thr = mean * hs                                             # (TB, C)

    a = a_ref[0, 0]                                             # pre-clamped scalar
    t = a * jnp.maximum(jnp.abs(x) - thr[:, :, None], 0.0)      # >= 0
    # sign(x) * t with exact PyTorch sign semantics (sign(0) == 0).
    out = jnp.where(x > 0.0, t, jnp.where(x < 0.0, -t, 0.0))
    o_ref[...] = out.astype(o_ref.dtype)


def _tpu_limits():
    """(per-core VMEM bytes, TensorCores per chip), conservative fallbacks."""
    vmem = 64 << 20                       # v7x per-core VMEM (smallest case)
    try:
        info = pltpu.get_tpu_info()
        vmem = int(getattr(info, "vmem_capacity_bytes", vmem) or vmem)
    except Exception:                     # API drift / not on TPU: stay safe
        pass
    cores = 2 if vmem <= (64 << 20) else 1   # v7x: 2 TCs; v5e/v6e: 1
    return vmem, cores


def _pick_block_batch(N, per_sample_bytes, tb_cap, *, min_bytes, min_steps):
    """Batch-tile: as large as tb_cap allows, but keep >= min_steps grid steps
    whenever blocks can stay >= min_bytes (so the DMA pipeline and both v7x
    cores stay busy)."""
    tb_steps = max(1, -(-N // min_steps))             # tb giving ~min_steps steps
    tb_floor = max(1, min_bytes // per_sample_bytes)  # tb giving ~min_bytes blocks
    tb = max(min(tb_steps, tb_cap), min(tb_floor, tb_cap))
    return max(1, min(tb, N))


def shrinkagev3pp(x, kernel_params, *, io_dtype=None, block_batch=None):
    """x: (N, C, L).  kernel_params: folded weights from fold_params.

    io_dtype: optional narrower I/O dtype (e.g. jnp.bfloat16) — halves HBM
    traffic on this bandwidth-bound kernel; internal math stays f32.
    block_batch: optional explicit batch-tile size (testing / tuning).
    """
    w1p, b1p, w2t, b2r, a_c = kernel_params
    N, C, L = x.shape
    mip = w1p.shape[1]
    oup = w2t.shape[1]
    assert oup == C, "Shrinkagev3pp requires inp == oup (threshold broadcast)"

    if io_dtype is not None and x.dtype != jnp.dtype(io_dtype):
        x = x.astype(io_dtype)
    itemsize = jnp.dtype(x.dtype).itemsize

    # ---- generation-aware VMEM budgeting -------------------------------
    vmem_cap, cores = _tpu_limits()
    budget = (vmem_cap * 3) // 4                       # leave compiler headroom
    weight_bytes = 8 * (C * mip + mip * oup + mip + oup)   # f32, x2 buffers
    slack = 2 << 20
    avail = max(budget - weight_bytes - slack, 4 << 20)

    per_sample_io = max(C * L * itemsize, 1)
    per_sample_f32 = C * L * 4
    # 2x in + 2x out double-buffered I/O blocks plus ~3 full-block f32 temps
    # (upcast copy, |x|-thr, shrunk) inside the kernel body.
    per_sample_vmem = 4 * per_sample_io + 3 * per_sample_f32
    io_cap = (16 << 20) if vmem_cap > (96 << 20) else (8 << 20)
    tb_cap = max(1, min(avail // per_sample_vmem, io_cap // per_sample_io))

    if block_batch is not None:
        TB = int(max(1, min(block_batch, N)))
    else:
        TB = _pick_block_batch(N, per_sample_io, tb_cap,
                               min_bytes=1 << 20, min_steps=4 * cores)

    vmem_limit = int(min(budget,
                         max(TB * per_sample_vmem + weight_bytes + slack,
                             32 << 20)))

    def wspec(shape):
        return pl.BlockSpec(shape, lambda n: (0, 0))

    kernel = functools.partial(shrinkage_kernel, inv_l=1.0 / float(L))

    return pl.pallas_call(
        kernel,
        out_shape=jax.ShapeDtypeStruct((N, C, L), x.dtype),
        grid=(pl.cdiv(N, TB),),                        # partial last block OK
        in_specs=[
            pl.BlockSpec((TB, C, L), lambda n: (n, 0, 0)),   # x tile
            wspec((C, mip)),                                 # W1' (BN folded)
            wspec((1, mip)),                                 # b1'
            wspec((mip, oup)),                               # W2^T
            wspec((1, oup)),                                 # b2
            pl.BlockSpec((1, 1), lambda n: (0, 0),
                         memory_space=pltpu.SMEM),           # pre-clamped a
        ],
        out_specs=pl.BlockSpec((TB, C, L), lambda n: (n, 0, 0)),
        compiler_params=pltpu.CompilerParams(
            dimension_semantics=("parallel",),
            vmem_limit_bytes=vmem_limit),
    )(x, w1p, b1p, w2t, b2r, a_c)


def fold_params(raw):
    """Fold eval-mode BN into conv1 and pre-clamp `a` (host-side glue)."""
    w1, b1, gamma, beta, rm, rv, w2, b2, a = raw
    mip = w1.shape[0]
    oup = w2.shape[0]
    scale = gamma * jax.lax.rsqrt(rv + 1e-5)                # (mip,)
    w1p = (w1 * scale[:, None]).T                           # (inp, mip)
    b1p = ((b1 - rm) * scale + beta).reshape(1, mip)
    w2t = w2.T                                              # (mip, oup)
    b2r = b2.reshape(1, oup)
    a_c = jnp.clip(a, 0.0, 1.0).reshape(1, 1)
    return w1p, b1p, w2t, b2r, a_c


def reference(x, raw):
    """Plain-JAX reference (eval-mode BN, unfused) for verification."""
    w1, b1, gamma, beta, rm, rv, w2, b2, a = raw
    mean = jnp.mean(x, axis=-1)                             # (N, C)
    y1 = mean @ w1.T + b1
    y1 = (y1 - rm) * jax.lax.rsqrt(rv + 1e-5) * gamma + beta
    y1 = jnp.maximum(y1, 0.0)
    y2 = y1 @ w2.T + b2
    hs = jnp.clip((y2 + 3.0) / 6.0, 0.0, 1.0)
    thr = mean * hs
    a_c = jnp.clip(a[0], 0.0, 1.0)
    shrunk = jnp.maximum(jnp.abs(x) - thr[:, :, None], 0.0)
    return jnp.sign(x) * (a_c * shrunk)


def make_raw_params(key, inp, oup, reduction=4):
    mip = int(max(8, inp // reduction))
    k1, k2, k3, k4, k5, k6, k7, k8 = jax.random.split(key, 8)
    w1 = 0.1 * jax.random.normal(k1, (mip, inp), jnp.float32)   # Conv1d(inp->mip)
    b1 = 0.1 * jax.random.normal(k2, (mip,), jnp.float32)
    gamma = 1.0 + 0.05 * jax.random.normal(k3, (mip,), jnp.float32)
    beta = 0.05 * jax.random.normal(k4, (mip,), jnp.float32)
    rm = 0.05 * jax.random.normal(k5, (mip,), jnp.float32)
    rv = jax.random.uniform(k6, (mip,), jnp.float32, 0.5, 1.5)
    w2 = 0.1 * jax.random.normal(k7, (oup, mip), jnp.float32)   # Conv1d(mip->oup)
    b2 = 0.1 * jax.random.normal(k8, (oup,), jnp.float32)
    a = jnp.array([0.48], jnp.float32)                          # nn.Parameter([0.48])
    return (w1, b1, gamma, beta, rm, rv, w2, b2, a)


if __name__ == "__main__":
    key = jax.random.PRNGKey(0)
    kx, kp, kx2 = jax.random.split(key, 3)

    # --- main check: f32, lane-dense L (multiple of 128), C multiple of 8 ---
    N, C, L = 4, 8, 256
    x = jax.random.normal(kx, (N, C, L), jnp.float32)
    raw = make_raw_params(kp, inp=C, oup=C, reduction=4)
    kparams = fold_params(raw)

    out = jax.block_until_ready(shrinkagev3pp(x, kparams))
    ref = reference(x, raw)
    assert out.shape == (N, C, L)
    assert jnp.allclose(out, ref, atol=1e-5, rtol=1e-5)

    # --- cdiv / partial-block path: N % TB != 0 and L not a multiple of 128 -
    N2, L2 = 5, 200
    x2 = jax.random.normal(kx2, (N2, C, L2), jnp.float32)
    out2 = jax.block_until_ready(shrinkagev3pp(x2, kparams, block_batch=2))
    ref2 = reference(x2, raw)
    assert out2.shape == (N2, C, L2)
    assert jnp.allclose(out2, ref2, atol=1e-5, rtol=1e-5)

    # --- bf16 I/O path (halved HBM traffic), relaxed tolerance --------------
    out_bf = jax.block_until_ready(
        shrinkagev3pp(x, kparams, io_dtype=jnp.bfloat16))
    ref_bf = reference(x.astype(jnp.bfloat16).astype(jnp.float32), raw)
    assert out_bf.dtype == jnp.bfloat16
    assert jnp.allclose(out_bf.astype(jnp.float32), ref_bf,
                        atol=3e-2, rtol=3e-2)

    print("KERNEL_OK")
</pallas_src>

<mosaic_0001>
module attributes {stable_mosaic.version = 11 : i64} {
  func.func @shrinkage_kernel(%arg0: i32, %arg1: memref<4x8x256xf32, #tpu.memory_space<vmem>>, %arg2: memref<8x8xf32, #tpu.memory_space<vmem>>, %arg3: memref<1x8xf32, #tpu.memory_space<vmem>>, %arg4: memref<8x8xf32, #tpu.memory_space<vmem>>, %arg5: memref<1x8xf32, #tpu.memory_space<vmem>>, %arg6: memref<1x1xf32, #tpu.memory_space<smem>>, %arg7: memref<4x8x256xf32, #tpu.memory_space<vmem>>) attributes {dimension_semantics = [#tpu.dimension_semantics<parallel>], iteration_bounds = array<i64: 1>, scalar_prefetch = 0 : i64, scratch_operands = 0 : i64, tpu.core_type = #tpu.core_type<tc>, window_params = [{transform_indices = @transform_0, window_bounds = array<i64: 4, 8, 256>}, {pipeline_mode = #tpu.pipeline_mode<synchronous>, transform_indices = @transform_1, window_bounds = array<i64: 8, 8>}, {pipeline_mode = #tpu.pipeline_mode<synchronous>, transform_indices = @transform_2, window_bounds = array<i64: 1, 8>}, {pipeline_mode = #tpu.pipeline_mode<synchronous>, transform_indices = @transform_3, window_bounds = array<i64: 8, 8>}, {pipeline_mode = #tpu.pipeline_mode<synchronous>, transform_indices = @transform_4, window_bounds = array<i64: 1, 8>}, {transform_indices = @transform_5, window_bounds = array<i64: 1, 1>}, {transform_indices = @transform_6, window_bounds = array<i64: 4, 8, 256>}]} {
    %c0 = arith.constant 0 : index
    %c0_0 = arith.constant 0 : index
    %c0_1 = arith.constant 0 : index
    %0 = vector.load %arg1[%c0, %c0_0, %c0_1] : memref<4x8x256xf32, #tpu.memory_space<vmem>>, vector<4x8x256xf32>
    %cst = arith.constant dense<0.000000e+00> : vector<4x8xf32>
    %1 = vector.multi_reduction <add>, %0, %cst [2] : vector<4x8x256xf32> to vector<4x8xf32>
    %cst_2 = arith.constant 3.906250e-03 : f32
    %2 = vector.broadcast %cst_2 : f32 to vector<4x8xf32>
    %3 = arith.mulf %1, %2 : vector<4x8xf32>
    %c0_3 = arith.constant 0 : index
    %c0_4 = arith.constant 0 : index
    %4 = vector.load %arg2[%c0_3, %c0_4] : memref<8x8xf32, #tpu.memory_space<vmem>>, vector<8x8xf32>
    %cst_5 = arith.constant dense<0.000000e+00> : vector<4x8xf32>
    %5 = tpu.matmul %3, %4, %cst_5 {dimension_numbers = #tpu.dot_dimension_numbers<[1], [0], [0], [1], [0, 0, 1, 1], [], []>} : vector<4x8xf32>, vector<8x8xf32>, vector<4x8xf32> -> vector<4x8xf32>
    %c0_6 = arith.constant 0 : index
    %c0_7 = arith.constant 0 : index
    %6 = vector.load %arg3[%c0_6, %c0_7] : memref<1x8xf32, #tpu.memory_space<vmem>>, vector<1x8xf32>
    %7 = vector.broadcast %6 : vector<1x8xf32> to vector<4x8xf32>
    %8 = arith.addf %5, %7 : vector<4x8xf32>
    %cst_8 = arith.constant 0.000000e+00 : f32
    %9 = vector.broadcast %cst_8 : f32 to vector<4x8xf32>
    %10 = arith.maximumf %8, %9 : vector<4x8xf32>
    %c0_9 = arith.constant 0 : index
    %c0_10 = arith.constant 0 : index
    %11 = vector.load %arg4[%c0_9, %c0_10] : memref<8x8xf32, #tpu.memory_space<vmem>>, vector<8x8xf32>
    %cst_11 = arith.constant dense<0.000000e+00> : vector<4x8xf32>
    %12 = tpu.matmul %10, %11, %cst_11 {dimension_numbers = #tpu.dot_dimension_numbers<[1], [0], [0], [1], [0, 0, 1, 1], [], []>} : vector<4x8xf32>, vector<8x8xf32>, vector<4x8xf32> -> vector<4x8xf32>
    %c0_12 = arith.constant 0 : index
    %c0_13 = arith.constant 0 : index
    %13 = vector.load %arg5[%c0_12, %c0_13] : memref<1x8xf32, #tpu.memory_space<vmem>>, vector<1x8xf32>
    %14 = vector.broadcast %13 : vector<1x8xf32> to vector<4x8xf32>
    %15 = arith.addf %12, %14 : vector<4x8xf32>
    %cst_14 = arith.constant 3.000000e+00 : f32
    %16 = vector.broadcast %cst_14 : f32 to vector<4x8xf32>
    %17 = arith.addf %15, %16 : vector<4x8xf32>
    %cst_15 = arith.constant 0.166666672 : f32
    %18 = vector.broadcast %cst_15 : f32 to vector<4x8xf32>
    %19 = arith.mulf %17, %18 : vector<4x8xf32>
    %cst_16 = arith.constant 0.000000e+00 : f32
    %cst_17 = arith.constant 1.000000e+00 : f32
    %20 = vector.broadcast %cst_16 : f32 to vector<4x8xf32>
    %21 = arith.maximumf %20, %19 : vector<4x8xf32>
    %22 = vector.broadcast %cst_17 : f32 to vector<4x8xf32>
    %23 = arith.minimumf %22, %21 : vector<4x8xf32>
    %24 = arith.mulf %3, %23 : vector<4x8xf32>
    %c0_18 = arith.constant 0 : index
    %c0_19 = arith.constant 0 : index
    %25 = memref.load %arg6[%c0_18, %c0_19] : memref<1x1xf32, #tpu.memory_space<smem>>
    %26 = math.absf %0 : vector<4x8x256xf32>
    %27 = vector.shape_cast %24 : vector<4x8xf32> to vector<4x8x1xf32>
    %28 = vector.broadcast %27 : vector<4x8x1xf32> to vector<4x8x256xf32>
    %29 = arith.subf %26, %28 : vector<4x8x256xf32>
    %cst_20 = arith.constant 0.000000e+00 : f32
    %30 = vector.broadcast %cst_20 : f32 to vector<4x8x256xf32>
    %31 = arith.maximumf %29, %30 : vector<4x8x256xf32>
    %32 = vector.broadcast %25 : f32 to vector<4x8x256xf32>
    %33 = arith.mulf %32, %31 : vector<4x8x256xf32>
    %cst_21 = arith.constant 0.000000e+00 : f32
    %34 = vector.broadcast %cst_21 : f32 to vector<4x8x256xf32>
    %35 = arith.cmpf ogt, %0, %34 : vector<4x8x256xf32>
    %cst_22 = arith.constant 0.000000e+00 : f32
    %36 = vector.broadcast %cst_22 : f32 to vector<4x8x256xf32>
    %37 = arith.cmpf olt, %0, %36 : vector<4x8x256xf32>
    %cst_23 = arith.constant 0.000000e+00 : f32
    %38 = vector.broadcast %cst_23 : f32 to vector<4x8x256xf32>
    %39 = arith.subf %38, %33 : vector<4x8x256xf32>
    %cst_24 = arith.constant 0.000000e+00 : f32
    %40 = vector.broadcast %cst_24 : f32 to vector<4x8x256xf32>
    %41 = arith.select %37, %39, %40 : vector<4x8x256xi1>, vector<4x8x256xf32>
    %42 = arith.select %35, %33, %41 : vector<4x8x256xi1>, vector<4x8x256xf32>
    %c0_25 = arith.constant 0 : index
    %c0_26 = arith.constant 0 : index
    %c0_27 = arith.constant 0 : index
    %43 = vector.load %arg7[%c0_25, %c0_26, %c0_27] : memref<4x8x256xf32, #tpu.memory_space<vmem>>, vector<4x8x256xf32>
    tpu.vector_store %arg7[%c0_25, %c0_26, %c0_27], %42 {strides = array<i32>} : memref<4x8x256xf32, #tpu.memory_space<vmem>>, vector<4x8x256xf32>,
    return
  }
  func.func @transform_0(%arg0: i32) -> (i32, i32, i32) {
    %c0_i32 = arith.constant 0 : i32
    %c0_i32_0 = arith.constant 0 : i32
    %c0_i32_1 = arith.constant 0 : i32
    return %arg0, %c0_i32, %c0_i32_0 : i32, i32, i32
  }
  func.func @transform_1(%arg0: i32) -> (i32, i32) {
    %c0_i32 = arith.constant 0 : i32
    %c0_i32_0 = arith.constant 0 : i32
    %c0_i32_1 = arith.constant 0 : i32
    return %c0_i32, %c0_i32_0 : i32, i32
  }
  func.func @transform_2(%arg0: i32) -> (i32, i32) {
    %c0_i32 = arith.constant 0 : i32
    %c0_i32_0 = arith.constant 0 : i32
    %c0_i32_1 = arith.constant 0 : i32
    return %c0_i32, %c0_i32_0 : i32, i32
  }
  func.func @transform_3(%arg0: i32) -> (i32, i32) {
    %c0_i32 = arith.constant 0 : i32
    %c0_i32_0 = arith.constant 0 : i32
    %c0_i32_1 = arith.constant 0 : i32
    return %c0_i32, %c0_i32_0 : i32, i32
  }
  func.func @transform_4(%arg0: i32) -> (i32, i32) {
    %c0_i32 = arith.constant 0 : i32
    %c0_i32_0 = arith.constant 0 : i32
    %c0_i32_1 = arith.constant 0 : i32
    return %c0_i32, %c0_i32_0 : i32, i32
  }
  func.func @transform_5(%arg0: i32) -> (i32, i32) {
    %c0_i32 = arith.constant 0 : i32
    %c0_i32_0 = arith.constant 0 : i32
    %c0_i32_1 = arith.constant 0 : i32
    return %c0_i32, %c0_i32_0 : i32, i32
  }
  func.func @transform_6(%arg0: i32) -> (i32, i32, i32) {
    %c0_i32 = arith.constant 0 : i32
    %c0_i32_0 = arith.constant 0 : i32
    %c0_i32_1 = arith.constant 0 : i32
    return %arg0, %c0_i32, %c0_i32_0 : i32, i32, i32
  }
}

</mosaic_0001>

<llo_original>
// kernel: tpu_custom_call.1
$region0: #{tpu_custom_call.1}
  #allocation0 [shape = 'u32[]', space=smem, size = 0x4, offset = 0x4, fixed_abs, tag = 'smem constant byte address 0x4 - core index']
  #allocation1 [shape = 'u32[144,128]{1,0:T(1,128)}', space=vmem, size = 0x12000, scoped, tag = 'internal scratch']
  #allocation2 [shape = 'f32[1,1]{1,0:T(1,128)S(6)}', space=smem, size = 0x200, scoped, tag = 'scoped memory for tpu_custom_call.1']
  %s0 = inlined_call_operand.hbm [shape: f32[4,8,256], index: 0, kind: input, shape index: {}]
  %s1 = inlined_call_operand.hbm [shape: f32[8,8], index: 1, kind: input, shape index: {}]
  %s2 = inlined_call_operand.vmem [shape: f32[1,8], index: 2, kind: input, shape index: {}]
  %s3 = inlined_call_operand.vmem [shape: f32[8,8], index: 3, kind: input, shape index: {}]
  %s4 = inlined_call_operand.vmem [shape: f32[1,8], index: 4, kind: input, shape index: {}]
  %s5 = inlined_call_operand.<no memory space> [shape: f32[1,1], index: 5, kind: input, shape index: {}]
  %s6 = inlined_call_operand.hbm [shape: f32[4,8,256], index: 6, kind: output, shape index: {}]
  %s7 = sld [smem:[#allocation0]]
  $region42: #{tpu_custom_call.1} parent=0
    _
  %s9 = ssub.s32 1, %s7
  %s10 = scalar_select 0, %s9, %s7
  %11 = sst [smem:[#allocation2]] %s5
  $region1: #{tpu_custom_call.1} parent=0
    #allocation3 [shape = 'u8[32768]{0}', space=vmem, size = 0x8000, scoped, tag = 'input window, operand 0, single buffered']
    #allocation4 [shape = 's32[1]{0}', space=sflag, size = 0x4, scoped, tag = 'scoped memory for tpu_custom_call.1']
    #allocation5 [shape = 's32[1]{0}', space=sflag, size = 0x4, scoped, tag = 'scoped memory for tpu_custom_call.1']
    #allocation6 [shape = 'u8[4096]{0}', space=vmem, size = 0x1000, scoped, tag = 'input window, operand 1, single buffered']
    #allocation7 [shape = 's32[1]{0}', space=sflag, size = 0x4, scoped, tag = 'scoped memory for tpu_custom_call.1']
    #allocation8 [shape = 'u8[32768]{0}', space=vmem, size = 0x8000, scoped, tag = 'output window, operand 0, single buffered']
    %12 = vsyncpa [#allocation4], 0
    %13 = vsyncpa [#allocation7], 0
    %14 = vsyncpa [#allocation5], 0
    // Predicated region
    $region2: #{tpu_custom_call.1} parent=1 // pred_check
      _
    $region3: #{tpu_custom_call.1} parent=1 // pred_check_branch
      %16 = sbr.rel (0) target = $region5
    $region4: #{tpu_custom_call.1} parent=1 // pred_region
      %s18 = ssub.s32 1024, 1024
      %19 = vsyncadd [#allocation4], %s18
      %s20 = sshll.u32 [#allocation3], 4
      %s21 = int_to_ptr.vmem [resolvable:$true] %s20
      %26 = dma.hbm_to_vmem [thread:$0]  %s0, 1024, %s21, [#allocation4], 256, 256, 16
    $region5: #{tpu_custom_call.1} parent=1 // pred_fallthru
      _
    // Predicated region
    $region6: #{tpu_custom_call.1} parent=1 // pred_check
      _
    $region7: #{tpu_custom_call.1} parent=1 // pred_check_branch
      %28 = sbr.rel (0) target = $region9
    $region8: #{tpu_custom_call.1} parent=1 // pred_region
      %s30 = ssub.s32 128, 128
      %31 = vsyncadd [#allocation7], %s30
      %s33 = sshll.u32 [#allocation6], 4
      %s34 = int_to_ptr.vmem [resolvable:$true] %s33
      %36 = dma.hbm_to_vmem [thread:$0]  %s1, 128, %s34, [#allocation7]
    $region9: #{tpu_custom_call.1} parent=1 // pred_fallthru
      _
    // Predicated region
    $region10: #{tpu_custom_call.1} parent=1 // pred_check
      _
    $region11: #{tpu_custom_call.1} parent=1 // pred_check_branch
      %38 = sbr.rel (0) target = $region13
    $region12: #{tpu_custom_call.1} parent=1 // pred_region
      _
    $region13: #{tpu_custom_call.1} parent=1 // pred_fallthru
      _
    // Predicated region
    $region14: #{tpu_custom_call.1} parent=1 // pred_check
      _
    $region15: #{tpu_custom_call.1} parent=1 // pred_check_branch
      %40 = sbr.rel (0) target = $region17
    $region16: #{tpu_custom_call.1} parent=1 // pred_region
      _
    $region17: #{tpu_custom_call.1} parent=1 // pred_fallthru
      _
    // Predicated region
    $region18: #{tpu_custom_call.1} parent=1 // pred_check
      _
    $region19: #{tpu_custom_call.1} parent=1 // pred_check_branch
      %42 = sbr.rel (0) target = $region21
    $region20: #{tpu_custom_call.1} parent=1 // pred_region
      _
    $region21: #{tpu_custom_call.1} parent=1 // pred_fallthru
      _
    // Predicated region
    $region22: #{tpu_custom_call.1} parent=1 // pred_check
      _
    $region23: #{tpu_custom_call.1} parent=1 // pred_check_branch
      %44 = sbr.rel (0) target = $region25
    $region24: #{tpu_custom_call.1} parent=1 // pred_region
      _
    $region25: #{tpu_custom_call.1} parent=1 // pred_fallthru
      _
    // Predicated region
    $region26: #{tpu_custom_call.1} parent=1 // pred_check
      _
    $region27: #{tpu_custom_call.1} parent=1 // pred_check_branch
      %46 = sbr.rel (0) target = $region29
    $region28: #{tpu_custom_call.1} parent=1 // pred_region
      %47 = dma.done [#allocation4], 1024
    $region29: #{tpu_custom_call.1} parent=1 // pred_fallthru
      _
    // Predicated region
    $region30: #{tpu_custom_call.1} parent=1 // pred_check
      _
    $region31: #{tpu_custom_call.1} parent=1 // pred_check_branch
      %49 = sbr.rel (0) target = $region33
    $region32: #{tpu_custom_call.1} parent=1 // pred_region
      %50 = dma.done [#allocation7], 128
    $region33: #{tpu_custom_call.1} parent=1 // pred_fallthru
      _
    %v51 = vld [vmem:[#allocation3] sm:$0xff]
    %v52 = vld [vmem:[#allocation3 + $0x8] sm:$0xff]
    %v53 = vld [vmem:[#allocation3 + $0x10] sm:$0xff]
    %v54 = vld [vmem:[#allocation3 + $0x18] sm:$0xff]
    %v55 = vld [vmem:[#allocation3 + $0x20] sm:$0xff]
    %v56 = vld [vmem:[#allocation3 + $0x28] sm:$0xff]
    %v57 = vld [vmem:[#allocation3 + $0x30] sm:$0xff]
    %v58 = vld [vmem:[#allocation3 + $0x38] sm:$0xff]
    %v59 = vadd.f32 %v51, %v52
    %60 = vadd.xlane.f32.xlu0 %v59
    %v61 = vpop.xlane.xlu0 %60
    %v62 = vadd.f32 %v53, %v54
    %63 = vadd.xlane.f32.xlu0 %v62
    %v64 = vpop.xlane.xlu0 %63
    %v65 = vadd.f32 %v55, %v56
    %66 = vadd.xlane.f32.xlu0 %v65
    %v67 = vpop.xlane.xlu0 %66
    %v68 = vadd.f32 %v57, %v58
    %69 = vadd.xlane.f32.xlu0 %v68
    %v70 = vpop.xlane.xlu0 %69
    %v71 = vmul.f32 %v61, 0.00390625
    %v72 = vmul.f32 %v64, 0.00390625
    %v73 = vmul.f32 %v67, 0.00390625
    %v74 = vmul.f32 %v70, 0.00390625
    %v75 = vld [vmem:[#allocation6] sm:$0xff]
    %v76 = vld [vmem:[%s2] sm:$0x1]
    %v78 = vlaneseq
    %v79 = vshrl.u32 %v78, 7
    %v80 = vsub.s32 0, %v79
    %v81 = vrot.slane %v76, %v80
    %v87 = vlaneseq
    %v88 = vand.u32 %v87, 127
    %v89 = vlaneseq
    %v90 = vshrl.u32 %v89, 7
    %v91 = vsub.s32 %v88, %v90
    %v92 = vrot.slane %v71, %v91
    %v93 = vlaneseq
    %v94 = vshrl.u32 %v93, 7
    %v95 = vsub.s32 %v88, %v94
    %v96 = vrot.slane %v72, %v95
    %v97 = vlaneseq
    %v98 = vshrl.u32 %v97, 7
    %v99 = vsub.s32 %v88, %v98
    %v100 = vrot.slane %v73, %v99
    %v101 = vlaneseq
    %v102 = vshrl.u32 %v101, 7
    %v103 = vsub.s32 %v88, %v102
    %v104 = vrot.slane %v74, %v103
    %vm105 = vcmask 1041409
    %v106 = vsel %vm105, %v96, %v92
    %vm107 = vcmask 1042434
    %v108 = vsel %vm107, %v100, %v106
    %vm109 = vcmask 1043459
    %v110 = vsel %vm109, %v104, %v108
    %vm111 = vcmask 64512
    %v112 = vsel %vm111, %v110, 0
    %114 = vmatprep.subr.mxu0 0.0
    %115 = vmatpush1.msra.mxu0 %v75
    %116 = vmatprep.subr.mxu0 0.0
    %117 = vmatpush1.msra.mxu0 0.0
    %118 = vmatprep.subr.mxu0 0.0
    %119 = vmatpush1.msra.mxu0 0.0
    %120 = vmatprep.subr.mxu0 0.0
    %121 = vmatpush1.msra.mxu0 0.0
    %122 = vmatprep.subr.mxu0 0.0
    %123 = vmatpush1.msra.mxu0 0.0
    %124 = vmatprep.subr.mxu0 0.0
    %125 = vmatpush1.msra.mxu0 0.0
    %126 = vmatprep.subr.mxu0 0.0
    %127 = vmatpush1.msra.mxu0 0.0
    %128 = vmatprep.subr.mxu0 0.0
    %129 = vmatpush1.msra.mxu0 0.0
    %130 = vmatprep.subr.mxu0 0.0
    %131 = vmatpush1.msra.mxu0 0.0
    %132 = vmatprep.subr.mxu0 0.0
    %133 = vmatpush1.msra.mxu0 0.0
    %134 = vmatprep.subr.mxu0 0.0
    %135 = vmatpush1.msra.mxu0 0.0
    %136 = vmatprep.subr.mxu0 0.0
    %137 = vmatpush1.msra.mxu0 0.0
    %138 = vmatprep.subr.mxu0 0.0
    %139 = vmatpush1.msra.mxu0 0.0
    %140 = vmatprep.subr.mxu0 0.0
    %141 = vmatpush1.msra.mxu0 0.0
    %142 = vmatprep.subr.mxu0 0.0
    %143 = vmatpush1.msra.mxu0 0.0
    %144 = vmatprep.subr.mxu0 0.0
    %145 = vmatpush1.msra.mxu0 0.0
    %146 = vmatprep.subr.mxu0 0.0
    %147 = vmatpush1.msra.mxu0 0.0
    %148 = vmatprep.subr.mxu0 0.0
    %149 = vmatpush1.msra.mxu0 0.0
    %150 = vmatprep.subr.mxu0 0.0
    %151 = vmatpush1.msra.mxu0 0.0
    %152 = vmatprep.subr.mxu0 0.0
    %153 = vmatpush1.msra.mxu0 0.0
    %154 = vmatprep.subr.mxu0 0.0
    %155 = vmatpush1.msra.mxu0 0.0
    %156 = vmatprep.subr.mxu0 0.0
    %157 = vmatpush1.msra.mxu0 0.0
    %158 = vmatprep.subr.mxu0 0.0
    %159 = vmatpush1.msra.mxu0 0.0
    %160 = vmatprep.subr.mxu0 0.0
    %161 = vmatpush1.msra.mxu0 0.0
    %162 = vmatprep.subr.mxu0 0.0
    %163 = vmatpush1.msra.mxu0 0.0
    %164 = vmatprep.subr.mxu0 0.0
    %165 = vmatpush1.msra.mxu0 0.0
    %166 = vmatprep.subr.mxu0 0.0
    %167 = vmatpush1.msra.mxu0 0.0
    %168 = vmatprep.subr.mxu0 0.0
    %169 = vmatpush1.msra.mxu0 0.0
    %170 = vmatprep.subr.mxu0 0.0
    %171 = vmatpush1.msra.mxu0 0.0
    %172 = vmatprep.subr.mxu0 0.0
    %173 = vmatpush1.msra.mxu0 0.0
    %174 = vmatprep.subr.mxu0 0.0
    %175 = vmatpush1.msra.mxu0 0.0
    %176 = vmatprep.subr.mxu0 0.0
    %177 = vmatpush1.msra.mxu0 0.0
    %178 = vmatprep.mubr.f32.mxu0 0.0
    %179 = vmatmul.mubr.f32.gmra.mrb[0].mxu0 %v112
    %v180 = vpop.f32.mrb[0].mxu0
    %v181 = vadd.f32 %v81, %v180
    %v182 = vpop.f32.mrb[0].mxu0
    %183 = vdwg.mxu0
    %v184 = vmax.f32 %v181, 0.0
    %v185 = vld [vmem:[%s3] sm:$0xff]
    %v186 = vld [vmem:[%s4] sm:$0x1]
    %v188 = vlaneseq
    %v189 = vshrl.u32 %v188, 7
    %v190 = vsub.s32 0, %v189
    %v191 = vrot.slane %v186, %v190
    %v194 = vsel %vm111, %v184, 0
    %196 = vmatprep.subr.mxu0 0.0
    %197 = vmatpush1.msra.mxu0 %v185
    %198 = vmatprep.subr.mxu0 0.0
    %199 = vmatpush1.msra.mxu0 0.0
    %200 = vmatprep.subr.mxu0 0.0
    %201 = vmatpush1.msra.mxu0 0.0
    %202 = vmatprep.subr.mxu0 0.0
    %203 = vmatpush1.msra.mxu0 0.0
    %204 = vmatprep.subr.mxu0 0.0
    %205 = vmatpush1.msra.mxu0 0.0
    %206 = vmatprep.subr.mxu0 0.0
    %207 = vmatpush1.msra.mxu0 0.0
    %208 = vmatprep.subr.mxu0 0.0
    %209 = vmatpush1.msra.mxu0 0.0
    %210 = vmatprep.subr.mxu0 0.0
    %211 = vmatpush1.msra.mxu0 0.0
    %212 = vmatprep.subr.mxu0 0.0
    %213 = vmatpush1.msra.mxu0 0.0
    %214 = vmatprep.subr.mxu0 0.0
    %215 = vmatpush1.msra.mxu0 0.0
    %216 = vmatprep.subr.mxu0 0.0
    %217 = vmatpush1.msra.mxu0 0.0
    %218 = vmatprep.subr.mxu0 0.0
    %219 = vmatpush1.msra.mxu0 0.0
    %220 = vmatprep.subr.mxu0 0.0
    %221 = vmatpush1.msra.mxu0 0.0
    %222 = vmatprep.subr.mxu0 0.0
    %223 = vmatpush1.msra.mxu0 0.0
    %224 = vmatprep.subr.mxu0 0.0
    %225 = vmatpush1.msra.mxu0 0.0
    %226 = vmatprep.subr.mxu0 0.0
    %227 = vmatpush1.msra.mxu0 0.0
    %228 = vmatprep.subr.mxu0 0.0
    %229 = vmatpush1.msra.mxu0 0.0
    %230 = vmatprep.subr.mxu0 0.0
    %231 = vmatpush1.msra.mxu0 0.0
    %232 = vmatprep.subr.mxu0 0.0
    %233 = vmatpush1.msra.mxu0 0.0
    %234 = vmatprep.subr.mxu0 0.0
    %235 = vmatpush1.msra.mxu0 0.0
    %236 = vmatprep.subr.mxu0 0.0
    %237 = vmatpush1.msra.mxu0 0.0
    %238 = vmatprep.subr.mxu0 0.0
    %239 = vmatpush1.msra.mxu0 0.0
    %240 = vmatprep.subr.mxu0 0.0
    %241 = vmatpush1.msra.mxu0 0.0
    %242 = vmatprep.subr.mxu0 0.0
    %243 = vmatpush1.msra.mxu0 0.0
    %244 = vmatprep.subr.mxu0 0.0
    %245 = vmatpush1.msra.mxu0 0.0
    %246 = vmatprep.subr.mxu0 0.0
    %247 = vmatpush1.msra.mxu0 0.0
    %248 = vmatprep.subr.mxu0 0.0
    %249 = vmatpush1.msra.mxu0 0.0
    %250 = vmatprep.subr.mxu0 0.0
    %251 = vmatpush1.msra.mxu0 0.0
    %252 = vmatprep.subr.mxu0 0.0
    %253 = vmatpush1.msra.mxu0 0.0
    %254 = vmatprep.subr.mxu0 0.0
    %255 = vmatpush1.msra.mxu0 0.0
    %256 = vmatprep.subr.mxu0 0.0
    %257 = vmatpush1.msra.mxu0 0.0
    %258 = vmatprep.subr.mxu0 0.0
    %259 = vmatpush1.msra.mxu0 0.0
    %260 = vmatprep.mubr.f32.mxu0 0.0
    %261 = vmatmul.mubr.f32.gmra.mrb[0].mxu0 %v194
    %v262 = vpop.f32.mrb[0].mxu0
    %v263 = vadd.f32 %v191, %v262
    %v264 = vpop.f32.mrb[0].mxu0
    %265 = vdwg.mxu0
    %v266 = vadd.f32 %v263, 3.0
    %v267 = vmul.f32 %v266, 0.16666667
    %v268 = vmax.f32 %v267, 0.0
    %v269 = vmin.f32 %v268, 1.0
    %v271 = vlaneseq
    %v272 = vshrl.u32 %v271, 7
    %v273 = vsub.s32 0, %v272
    %v274 = vrot.slane %v269, %v273
    %276 = vbcast.lane.b32.xlu0 %v274, 256
    %v277 = vpop.permute.xlu0 %276
    %v278 = vlaneseq
    %v279 = vshrl.u32 %v278, 7
    %v280 = vsub.s32 1, %v279
    %v281 = vrot.slane %v269, %v280
    %283 = vbcast.lane.b32.xlu0 %v281, 256
    %v284 = vpop.permute.xlu0 %283
    %v285 = vlaneseq
    %v286 = vshrl.u32 %v285, 7
    %v287 = vsub.s32 2, %v286
    %v288 = vrot.slane %v269, %v287
    %290 = vbcast.lane.b32.xlu0 %v288, 256
    %v291 = vpop.permute.xlu0 %290
    %v292 = vlaneseq
    %v293 = vshrl.u32 %v292, 7
    %v294 = vsub.s32 3, %v293
    %v295 = vrot.slane %v269, %v294
    %297 = vbcast.lane.b32.xlu0 %v295, 256
    %v298 = vpop.permute.xlu0 %297
    %v303 = vmul.f32 %v71, %v277
    %v304 = vmul.f32 %v72, %v284
    %v305 = vmul.f32 %v73, %v291
    %v306 = vmul.f32 %v74, %v298
    %s307 = sld [smem:[#allocation2]]
    %v308 = vand.u32 2147483647, %v51
    %v309 = vand.u32 2147483647, %v52
    %v310 = vand.u32 2147483647, %v53
    %v311 = vand.u32 2147483647, %v54
    %v312 = vand.u32 2147483647, %v55
    %v313 = vand.u32 2147483647, %v56
    %v314 = vand.u32 2147483647, %v57
    %v315 = vand.u32 2147483647, %v58
    %317 = vset.pattern.permute.xlu0 0
    %318 = vperm.xlu0 %317, %v303
    %v319 = vpop.permute.xlu0 %318
    %322 = vset.pattern.permute.xlu0 0
    %323 = vperm.xlu0 %322, %v304
    %v324 = vpop.permute.xlu0 %323
    %327 = vset.pattern.permute.xlu0 0
    %328 = vperm.xlu0 %327, %v305
    %v329 = vpop.permute.xlu0 %328
    %332 = vset.pattern.permute.xlu0 0
    %333 = vperm.xlu0 %332, %v306
    %v334 = vpop.permute.xlu0 %333
    %v336 = vsub.f32 %v308, %v319
    %v337 = vsub.f32 %v309, %v319
    %v338 = vsub.f32 %v310, %v324
    %v339 = vsub.f32 %v311, %v324
    %v340 = vsub.f32 %v312, %v329
    %v341 = vsub.f32 %v313, %v329
    %v342 = vsub.f32 %v314, %v334
    %v343 = vsub.f32 %v315, %v334
    %v344 = vmax.f32 %v336, 0.0
    %v345 = vmax.f32 %v337, 0.0
    %v346 = vmax.f32 %v338, 0.0
    %v347 = vmax.f32 %v339, 0.0
    %v348 = vmax.f32 %v340, 0.0
    %v349 = vmax.f32 %v341, 0.0
    %v350 = vmax.f32 %v342, 0.0
    %v351 = vmax.f32 %v343, 0.0
    %v352 = vstv %s307
    %v353 = vmul.f32 %v352, %v344
    %v354 = vmul.f32 %v352, %v345
    %v355 = vmul.f32 %v352, %v346
    %v356 = vmul.f32 %v352, %v347
    %v357 = vmul.f32 %v352, %v348
    %v358 = vmul.f32 %v352, %v349
    %v359 = vmul.f32 %v352, %v350
    %v360 = vmul.f32 %v352, %v351
    %vm361 = vcmp.gt.f32.partialorder %v51, 0.0
    %vm362 = vcmp.gt.f32.partialorder %v52, 0.0
    %vm363 = vcmp.gt.f32.partialorder %v53, 0.0
    %vm364 = vcmp.gt.f32.partialorder %v54, 0.0
    %vm365 = vcmp.gt.f32.partialorder %v55, 0.0
    %vm366 = vcmp.gt.f32.partialorder %v56, 0.0
    %vm367 = vcmp.gt.f32.partialorder %v57, 0.0
    %vm368 = vcmp.gt.f32.partialorder %v58, 0.0
    %vm369 = vcmp.lt.f32.partialorder %v51, 0.0
    %vm370 = vcmp.lt.f32.partialorder %v52, 0.0
    %vm371 = vcmp.lt.f32.partialorder %v53, 0.0
    %vm372 = vcmp.lt.f32.partialorder %v54, 0.0
    %vm373 = vcmp.lt.f32.partialorder %v55, 0.0
    %vm374 = vcmp.lt.f32.partialorder %v56, 0.0
    %vm375 = vcmp.lt.f32.partialorder %v57, 0.0
    %vm376 = vcmp.lt.f32.partialorder %v58, 0.0
    %v377 = vsub.f32 0.0, %v353
    %v378 = vsub.f32 0.0, %v354
    %v379 = vsub.f32 0.0, %v355
    %v380 = vsub.f32 0.0, %v356
    %v381 = vsub.f32 0.0, %v357
    %v382 = vsub.f32 0.0, %v358
    %v383 = vsub.f32 0.0, %v359
    %v384 = vsub.f32 0.0, %v360
    %v385 = vsel %vm369, %v377, 0.0
    %v386 = vsel %vm370, %v378, 0.0
    %v387 = vsel %vm371, %v379, 0.0
    %v388 = vsel %vm372, %v380, 0.0
    %v389 = vsel %vm373, %v381, 0.0
    %v390 = vsel %vm374, %v382, 0.0
    %v391 = vsel %vm375, %v383, 0.0
    %v392 = vsel %vm376, %v384, 0.0
    %v393 = vsel %vm361, %v353, %v385
    %v394 = vsel %vm362, %v354, %v386
    %v395 = vsel %vm363, %v355, %v387
    %v396 = vsel %vm364, %v356, %v388
    %v397 = vsel %vm365, %v357, %v389
    %v398 = vsel %vm366, %v358, %v390
    %v399 = vsel %vm367, %v359, %v391
    %v400 = vsel %vm368, %v360, %v392
    %401 = vst [vmem:[#allocation8] sm:$0xff] %v393
    %402 = vst [vmem:[#allocation8 + $0x8] sm:$0xff] %v394
    %403 = vst [vmem:[#allocation8 + $0x10] sm:$0xff] %v395
    %404 = vst [vmem:[#allocation8 + $0x18] sm:$0xff] %v396
    %405 = vst [vmem:[#allocation8 + $0x20] sm:$0xff] %v397
    %406 = vst [vmem:[#allocation8 + $0x28] sm:$0xff] %v398
    %407 = vst [vmem:[#allocation8 + $0x30] sm:$0xff] %v399
    %408 = vst [vmem:[#allocation8 + $0x38] sm:$0xff] %v400
    // Predicated region
    $region34: #{tpu_custom_call.1} parent=1 // pred_check
      _
    $region35: #{tpu_custom_call.1} parent=1 // pred_check_branch
      %410 = sbr.rel (0) target = $region37
    $region36: #{tpu_custom_call.1} parent=1 // pred_region
      %s412 = ssub.s32 1024, 1024
      %413 = vsyncadd [#allocation5], %s412
      %s414 = sshll.u32 [#allocation8], 4
      %s415 = int_to_ptr.vmem [resolvable:$true] %s414
      %420 = dma.vmem_to_hbm [thread:$0]  %s415, 1024, %s6, [#allocation5], 256, 256, 16
    $region37: #{tpu_custom_call.1} parent=1 // pred_fallthru
      _
    // Predicated region
    $region38: #{tpu_custom_call.1} parent=1 // pred_check
      _
    $region39: #{tpu_custom_call.1} parent=1 // pred_check_branch
      %422 = sbr.rel (0) target = $region41
    $region40: #{tpu_custom_call.1} parent=1 // pred_region
      %423 = dma.done [#allocation5], 1024
    $region41: #{tpu_custom_call.1} parent=1 // pred_fallthru
      _
    %424 = vsyncpa [#allocation4], 1
    %425 = vsyncpa [#allocation7], 1
    %426 = vsyncpa [#allocation5], 1

</llo_original>
